<compile_context>
chip_gen: v7x
topology: tpu7x:2x2x1
jax: 0.10.0
libtpu: 0.0.40
codegen_flags: <defaults>
</compile_context>

<pallas_src>
import jax
import jax.numpy as jnp
from jax.experimental import pallas as pl
from jax.experimental.pallas import tpu as pltpu


def weighted_pool_kernel(x_ref, mask_ref, w_ref, out_ref):
    # x_ref    : (Bt, L, D)  input dtype (f32 or bf16)
    # mask_ref : (Bt, L, 1)  f32   (L on sublanes, matches x's layout)
    # w_ref    : (1, D)      f32   (lane-dense)
    # out_ref  : (Bt, D)     input dtype (lane-dense)
    x = x_ref[...].astype(jnp.float32)                 # upcast in-vreg (bf16 path)
    m = mask_ref[...]                                  # (Bt, L, 1)
    w = w_ref[...]                                     # (1, D) f32

    # alpha = x @ weight : VPU multiply + lane reduce over D, keepdims so L
    # stays on the sublane axis (no lane<->sublane relayout anywhere below).
    alpha = jnp.sum(x * w[None, :, :], axis=-1, keepdims=True)   # (Bt, L, 1) f32

    # mask_logits: alpha + (1 - mask) * -1e30
    alpha = alpha + (1.0 - m) * (-1e30)

    # Numerically stable softmax over L (sublane reduces).
    amax = jnp.max(alpha, axis=1, keepdims=True)       # (Bt, 1, 1)
    e = jnp.exp(alpha - amax)                          # (Bt, L, 1)
    denom = jnp.sum(e, axis=1, keepdims=True)          # (Bt, 1, 1)

    # pooled = sum_L x * softmax(alpha); normalize at the end.
    pooled = jnp.sum(x * e, axis=1)                    # (Bt, D) f32

    # Reciprocal on the EUP + one Newton step (Bt values, ~free, full f32 acc).
    inv = pl.reciprocal(denom, approx=True)
    inv = inv * (2.0 - denom * inv)
    out_ref[...] = (pooled * inv[:, 0, :]).astype(out_ref.dtype)


def _vmem_capacity_bytes():
    """Per-generation VMEM capacity; conservative fallback if the query fails."""
    try:
        cap = int(pltpu.get_tpu_info().vmem_capacity_bytes)
        if cap > 0:
            return cap
    except Exception:
        pass
    return 64 << 20  # v7x per-TC VMEM (smallest of the supported generations)


def _choose_bt(B, max_rows):
    """Rows per grid step (Bt) and padded batch (Bp).

    Bt must be a multiple of 8 OR equal to Bp so the (Bt, D) output block
    satisfies the (8,128) constraint. Batch is padded by at most 7 rows.
    """
    max_rows = max(1, int(max_rows))
    if max_rows >= B:
        # Whole batch fits one tile. Still emit >= 2 grid steps when it is free
        # (B % 16 == 0) so both v7x TensorCores get work under "parallel".
        if B >= 16 and B % 16 == 0:
            return B // 2, B
        return B, B
    rows8 = max(8, (max_rows // 8) * 8)
    Bp = ((B + 7) // 8) * 8
    for bt in range(min(rows8, Bp), 7, -8):
        if Bp % bt == 0:
            return bt, Bp
    return 8, Bp


def weighted_pool(x, mask, weight, *, target_tile_bytes=8 << 20):
    """x: (B, L, D) f32/bf16; mask: (B, L) {0,1}; weight: (D,1)/(D,) -> (B, D)."""
    B, L, D = x.shape
    x_itemsize = jnp.dtype(x.dtype).itemsize

    mask3 = mask.astype(jnp.float32).reshape(B, L, 1)      # (sublane=L) layout
    w_row = jnp.asarray(weight, jnp.float32).reshape(1, D)  # lane-dense weight

    cap = _vmem_capacity_bytes()
    Lp = ((L + 7) // 8) * 8
    Dl = max(((D + 127) // 128) * 128, 128)
    # Per-batch-row VMEM cost of one tile (x slab + lane-padded mask + out row).
    row_cost = L * D * x_itemsize + Lp * 128 * 4 + Dl * x_itemsize
    # Keep double-buffered tiles well inside the generation's VMEM.
    target_eff = max(row_cost, min(int(target_tile_bytes), cap // 5))
    Bt, Bp = _choose_bt(B, target_eff // row_cost)
    # TODO(synk): if a single 8-row slab ever exceeds VMEM (enormous L*D), tile
    # over L/D as well; not needed for WeightedPool's typical shapes.

    if Bp != B:
        pad = Bp - B
        x_in = jnp.pad(x, ((0, pad), (0, 0), (0, 0)))
        m_in = jnp.pad(mask3, ((0, pad), (0, 0), (0, 0)))  # mask=0 rows stay finite
    else:
        x_in, m_in = x, mask3

    grid = (Bp // Bt,)

    # VMEM budget: double-buffered x + mask + out (+ weight), plus slack.
    x_tile = Bt * L * D * x_itemsize
    mask_tile = Bt * Lp * 128 * 4
    out_tile = Bt * Dl * x_itemsize
    w_tile = 8 * Dl * 4
    need = 2 * (x_tile + mask_tile + out_tile + w_tile) + (2 << 20)
    vmem_limit = int(min(max(need, 32 << 20), max(cap - (4 << 20), need)))

    bytes_accessed = (Bp * L * D * x_itemsize      # x read
                      + Bp * L * 4                 # mask read
                      + D * 4                      # weight read
                      + Bp * D * x_itemsize)       # out write
    cost = pl.CostEstimate(flops=4 * Bp * L * D,
                           transcendentals=Bp * L,
                           bytes_accessed=int(bytes_accessed))

    out = pl.pallas_call(
        weighted_pool_kernel,
        out_shape=jax.ShapeDtypeStruct((Bp, D), x.dtype),
        grid_spec=pltpu.PrefetchScalarGridSpec(
            num_scalar_prefetch=0,
            grid=grid,
            in_specs=[
                pl.BlockSpec((Bt, L, D), lambda b: (b, 0, 0)),
                pl.BlockSpec((Bt, L, 1), lambda b: (b, 0, 0)),
                pl.BlockSpec((1, D), lambda b: (0, 0)),
            ],
            out_specs=pl.BlockSpec((Bt, D), lambda b: (b, 0)),
        ),
        compiler_params=pltpu.CompilerParams(
            dimension_semantics=("parallel",),
            vmem_limit_bytes=vmem_limit),
        cost_estimate=cost,
    )(x_in, m_in, w_row)

    return out[:B] if Bp != B else out


def weighted_pool_ref(x, mask, weight):
    alpha = jnp.einsum("bld,de->ble", x, weight)
    alpha = alpha + (1.0 - mask.astype(jnp.float32))[..., None] * (-1e30)
    alphas = jax.nn.softmax(alpha, axis=1)
    pooled = jnp.einsum("bld,ble->bde", x, alphas)
    return pooled[..., 0]


if __name__ == "__main__":
    B, L, D = 2, 8, 32

    key = jax.random.PRNGKey(0)
    kx, kw, km = jax.random.split(key, 3)

    x = jax.random.normal(kx, (B, L, D), dtype=jnp.float32)

    # deterministic xavier_uniform for weight of shape (dim, 1)
    bound = (6.0 / (D + 1)) ** 0.5
    weight = jax.random.uniform(kw, (D, 1), dtype=jnp.float32,
                                minval=-bound, maxval=bound)

    # binary mask with at least one valid position per row
    mask = (jax.random.uniform(km, (B, L)) > 0.3).astype(jnp.float32)
    mask = mask.at[:, 0].set(1.0)

    out = weighted_pool(x, mask, weight)
    jax.block_until_ready(out)

    ref = weighted_pool_ref(x, mask, weight)
    assert out.shape == (B, D)
    assert jnp.allclose(out, ref, atol=1e-5, rtol=1e-5), "mismatch vs reference"

    print("KERNEL_OK")
</pallas_src>

<mosaic_0001>
module attributes {stable_mosaic.version = 11 : i64} {
  func.func @weighted_pool_kernel(%arg0: i32, %arg1: memref<2x8x32xf32, #tpu.memory_space<vmem>>, %arg2: memref<2x8x1xf32, #tpu.memory_space<vmem>>, %arg3: memref<1x32xf32, #tpu.memory_space<vmem>>, %arg4: memref<2x32xf32, #tpu.memory_space<vmem>>) attributes {dimension_semantics = [#tpu.dimension_semantics<parallel>], iteration_bounds = array<i64: 1>, scalar_prefetch = 0 : i64, scratch_operands = 0 : i64, tpu.core_type = #tpu.core_type<tc>, window_params = [{transform_indices = @transform_0, window_bounds = array<i64: 2, 8, 32>}, {transform_indices = @transform_1, window_bounds = array<i64: 2, 8, 1>}, {pipeline_mode = #tpu.pipeline_mode<synchronous>, transform_indices = @transform_2, window_bounds = array<i64: 1, 32>}, {transform_indices = @transform_3, window_bounds = array<i64: 2, 32>}]} {
    %c0 = arith.constant 0 : index
    %c0_0 = arith.constant 0 : index
    %c0_1 = arith.constant 0 : index
    %0 = vector.load %arg1[%c0, %c0_0, %c0_1] : memref<2x8x32xf32, #tpu.memory_space<vmem>>, vector<2x8x32xf32>
    %c0_2 = arith.constant 0 : index
    %c0_3 = arith.constant 0 : index
    %c0_4 = arith.constant 0 : index
    %1 = vector.load %arg2[%c0_2, %c0_3, %c0_4] : memref<2x8x1xf32, #tpu.memory_space<vmem>>, vector<2x8x1xf32>
    %c0_5 = arith.constant 0 : index
    %c0_6 = arith.constant 0 : index
    %2 = vector.load %arg3[%c0_5, %c0_6] : memref<1x32xf32, #tpu.memory_space<vmem>>, vector<1x32xf32>
    %3 = vector.shape_cast %2 : vector<1x32xf32> to vector<1x1x32xf32>
    %4 = vector.broadcast %3 : vector<1x1x32xf32> to vector<2x8x32xf32>
    %5 = arith.mulf %0, %4 : vector<2x8x32xf32>
    %cst = arith.constant dense<0.000000e+00> : vector<2x8xf32>
    %6 = vector.multi_reduction <add>, %5, %cst [2] : vector<2x8x32xf32> to vector<2x8xf32>
    %7 = vector.shape_cast %6 : vector<2x8xf32> to vector<2x8x1xf32>
    %cst_7 = arith.constant 1.000000e+00 : f32
    %8 = vector.broadcast %cst_7 : f32 to vector<2x8x1xf32>
    %9 = arith.subf %8, %1 : vector<2x8x1xf32>
    %cst_8 = arith.constant -1.000000e+30 : f32
    %10 = vector.broadcast %cst_8 : f32 to vector<2x8x1xf32>
    %11 = arith.mulf %9, %10 : vector<2x8x1xf32>
    %12 = arith.addf %7, %11 : vector<2x8x1xf32>
    %cst_9 = arith.constant dense<0xFF800000> : vector<2x1xf32>
    %13 = vector.multi_reduction <maximumf>, %12, %cst_9 [1] : vector<2x8x1xf32> to vector<2x1xf32>
    %14 = vector.shape_cast %13 : vector<2x1xf32> to vector<2x1x1xf32>
    %15 = vector.broadcast %14 : vector<2x1x1xf32> to vector<2x8x1xf32>
    %16 = arith.subf %12, %15 : vector<2x8x1xf32>
    %17 = math.exp %16 : vector<2x8x1xf32>
    %cst_10 = arith.constant dense<0.000000e+00> : vector<2x1xf32>
    %18 = vector.multi_reduction <add>, %17, %cst_10 [1] : vector<2x8x1xf32> to vector<2x1xf32>
    %19 = vector.shape_cast %18 : vector<2x1xf32> to vector<2x1x1xf32>
    %20 = vector.broadcast %17 : vector<2x8x1xf32> to vector<2x8x32xf32>
    %21 = arith.mulf %0, %20 : vector<2x8x32xf32>
    %cst_11 = arith.constant dense<0.000000e+00> : vector<2x32xf32>
    %22 = vector.multi_reduction <add>, %21, %cst_11 [1] : vector<2x8x32xf32> to vector<2x32xf32>
    %23 = tpu.reciprocal %19 {approx = true} : vector<2x1x1xf32> -> vector<2x1x1xf32>
    %24 = arith.mulf %19, %23 : vector<2x1x1xf32>
    %cst_12 = arith.constant 2.000000e+00 : f32
    %25 = vector.broadcast %cst_12 : f32 to vector<2x1x1xf32>
    %26 = arith.subf %25, %24 : vector<2x1x1xf32>
    %27 = arith.mulf %23, %26 : vector<2x1x1xf32>
    %28 = vector.shape_cast %27 : vector<2x1x1xf32> to vector<2x1xf32>
    %29 = vector.broadcast %28 : vector<2x1xf32> to vector<2x32xf32>
    %30 = arith.mulf %22, %29 : vector<2x32xf32>
    %c0_13 = arith.constant 0 : index
    %c0_14 = arith.constant 0 : index
    %31 = vector.load %arg4[%c0_13, %c0_14] : memref<2x32xf32, #tpu.memory_space<vmem>>, vector<2x32xf32>
    tpu.vector_store %arg4[%c0_13, %c0_14], %30 {strides = array<i32>} : memref<2x32xf32, #tpu.memory_space<vmem>>, vector<2x32xf32>,
    return
  }
  func.func @transform_0(%arg0: i32) -> (i32, i32, i32) {
    %c0_i32 = arith.constant 0 : i32
    %c0_i32_0 = arith.constant 0 : i32
    %c0_i32_1 = arith.constant 0 : i32
    return %arg0, %c0_i32, %c0_i32_0 : i32, i32, i32
  }
  func.func @transform_1(%arg0: i32) -> (i32, i32, i32) {
    %c0_i32 = arith.constant 0 : i32
    %c0_i32_0 = arith.constant 0 : i32
    %c0_i32_1 = arith.constant 0 : i32
    return %arg0, %c0_i32, %c0_i32_0 : i32, i32, i32
  }
  func.func @transform_2(%arg0: i32) -> (i32, i32) {
    %c0_i32 = arith.constant 0 : i32
    %c0_i32_0 = arith.constant 0 : i32
    %c0_i32_1 = arith.constant 0 : i32
    return %c0_i32, %c0_i32_0 : i32, i32
  }
  func.func @transform_3(%arg0: i32) -> (i32, i32) {
    %c0_i32 = arith.constant 0 : i32
    %c0_i32_0 = arith.constant 0 : i32
    return %arg0, %c0_i32 : i32, i32
  }
}

</mosaic_0001>

<llo_original>
// kernel: tpu_custom_call.1
$region0: #{tpu_custom_call.1}
  #allocation0 [shape = 'u32[]', space=smem, size = 0x4, offset = 0x4, fixed_abs, tag = 'smem constant byte address 0x4 - core index']
  #allocation1 [shape = 'u32[144,128]{1,0:T(1,128)}', space=vmem, size = 0x12000, scoped, tag = 'internal scratch']
  %s0 = inlined_call_operand.vmem [shape: f32[2,8,32], index: 0, kind: input, shape index: {}]
  %s1 = inlined_call_operand.vmem [shape: f32[2,8,1], index: 1, kind: input, shape index: {}]
  %s2 = inlined_call_operand.vmem [shape: f32[1,32], index: 2, kind: input, shape index: {}]
  %s3 = inlined_call_operand.hbm [shape: f32[2,32], index: 3, kind: output, shape index: {}]
  %s4 = sld [smem:[#allocation0]]
  $region22: #{tpu_custom_call.1} parent=0
    _
  %s6 = ssub.s32 1, %s4
  %s7 = scalar_select 0, %s6, %s4
  $region1: #{tpu_custom_call.1} parent=0
    #allocation2 [shape = 'u8[1024]{0}', space=vmem, size = 0x400, scoped, tag = 'output window, operand 0, single buffered']
    #allocation3 [shape = 's32[1]{0}', space=sflag, size = 0x4, scoped, tag = 'scoped memory for tpu_custom_call.1']
    %8 = vsyncpa [#allocation3], 0
    // Predicated region
    $region2: #{tpu_custom_call.1} parent=1 // pred_check
      _
    $region3: #{tpu_custom_call.1} parent=1 // pred_check_branch
      %10 = sbr.rel (0) target = $region5
    $region4: #{tpu_custom_call.1} parent=1 // pred_region
      _
    $region5: #{tpu_custom_call.1} parent=1 // pred_fallthru
      _
    // Predicated region
    $region6: #{tpu_custom_call.1} parent=1 // pred_check
      _
    $region7: #{tpu_custom_call.1} parent=1 // pred_check_branch
      %12 = sbr.rel (0) target = $region9
    $region8: #{tpu_custom_call.1} parent=1 // pred_region
      _
    $region9: #{tpu_custom_call.1} parent=1 // pred_fallthru
      _
    // Predicated region
    $region10: #{tpu_custom_call.1} parent=1 // pred_check
      _
    $region11: #{tpu_custom_call.1} parent=1 // pred_check_branch
      %14 = sbr.rel (0) target = $region13
    $region12: #{tpu_custom_call.1} parent=1 // pred_region
      _
    $region13: #{tpu_custom_call.1} parent=1 // pred_fallthru
      _
    %v15 = vld [vmem:[%s0] sm:$0xff]
    %v16 = vld [vmem:[%s0 + $0x8] sm:$0xff]
    %v17 = vld [vmem:[%s1] sm:$0xff]
    %v18 = vld [vmem:[%s1 + $0x8] sm:$0xff]
    %v19 = vld [vmem:[%s2] sm:$0x1]
    %v21 = vlaneseq
    %v22 = vshrl.u32 %v21, 7
    %v23 = vsub.s32 0, %v22
    %v24 = vrot.slane %v19, %v23
    %v26 = vmul.f32 %v15, %v24
    %v27 = vmul.f32 %v16, %v24
    %vm28 = vcmask 261120
    %v29 = vsel %vm28, %v26, 0.0
    %30 = vadd.xlane.f32.xlu0 %v29
    %v31 = vpop.xlane.xlu0 %30
    %v32 = vsel %vm28, %v27, 0.0
    %33 = vadd.xlane.f32.xlu0 %v32
    %v34 = vpop.xlane.xlu0 %33
    %v35 = vsub.f32 1.0, %v17
    %v36 = vsub.f32 1.0, %v18
    %v37 = vmul.f32 %v35, -1e+30
    %v38 = vmul.f32 %v36, -1e+30
    %v39 = vadd.f32 %v31, %v37
    %v40 = vadd.f32 %v34, %v38
    %vm41 = vcmask 7168
    %v42 = vsel %vm41, %v39, -inf
    %v43 = vrot.slane %v42, 4
    %v44 = vmax.f32 %v42, %v43
    %v45 = vrot.slane %v44, 2
    %v46 = vmax.f32 %v44, %v45
    %v47 = vrot.slane %v46, 1
    %v48 = vmax.f32 %v46, %v47
    %v49 = vsel %vm41, %v40, -inf
    %v50 = vrot.slane %v49, 4
    %v51 = vmax.f32 %v49, %v50
    %v52 = vrot.slane %v51, 2
    %v53 = vmax.f32 %v51, %v52
    %v54 = vrot.slane %v53, 1
    %v55 = vmax.f32 %v53, %v54
    %v56 = vsub.f32 %v39, %v48
    %v57 = vsub.f32 %v40, %v55
    %v58 = vmul.f32 %v56, 1.442695
    %v59 = vpow.pop %v58
    %v60 = vmul.f32 %v57, 1.442695
    %v61 = vpow.pop %v60
    %v62 = vsel %vm41, %v59, 0.0
    %v63 = vrot.slane %v62, 4
    %v64 = vadd.f32 %v62, %v63
    %v65 = vrot.slane %v64, 2
    %v66 = vadd.f32 %v64, %v65
    %v67 = vrot.slane %v66, 1
    %v68 = vadd.f32 %v66, %v67
    %v69 = vsel %vm41, %v61, 0.0
    %v70 = vrot.slane %v69, 4
    %v71 = vadd.f32 %v69, %v70
    %v72 = vrot.slane %v71, 2
    %v73 = vadd.f32 %v71, %v72
    %v74 = vrot.slane %v73, 1
    %v75 = vadd.f32 %v73, %v74
    %77 = vset.pattern.permute.xlu0 0
    %78 = vperm.xlu0 %77, %v59
    %v79 = vpop.permute.xlu0 %78
    %82 = vset.pattern.permute.xlu0 0
    %83 = vperm.xlu0 %82, %v61
    %v84 = vpop.permute.xlu0 %83
    %v86 = vmul.f32 %v15, %v79
    %v87 = vmul.f32 %v16, %v84
    %v88 = vsel %vm28, %v86, 0.0
    %v89 = vrot.slane %v88, 4
    %v90 = vadd.f32 %v88, %v89
    %v91 = vrot.slane %v90, 2
    %v92 = vadd.f32 %v90, %v91
    %v93 = vrot.slane %v92, 1
    %v94 = vadd.f32 %v92, %v93
    %v95 = vsel %vm28, %v87, 0.0
    %v96 = vrot.slane %v95, 4
    %v97 = vadd.f32 %v95, %v96
    %v98 = vrot.slane %v97, 2
    %v99 = vadd.f32 %v97, %v98
    %v100 = vrot.slane %v99, 1
    %v101 = vadd.f32 %v99, %v100
    %v102 = vrcp.pop %v68
    %v103 = vrcp.pop %v75
    %v104 = vmul.f32 %v68, %v102
    %v105 = vmul.f32 %v75, %v103
    %v106 = vsub.f32 2.0, %v104
    %v107 = vsub.f32 2.0, %v105
    %v108 = vmul.f32 %v102, %v106
    %v109 = vmul.f32 %v103, %v107
    %111 = vset.pattern.permute.xlu0 0
    %112 = vperm.xlu0 %111, %v108
    %v113 = vpop.permute.xlu0 %112
    %116 = vset.pattern.permute.xlu0 0
    %117 = vperm.xlu0 %116, %v109
    %v118 = vpop.permute.xlu0 %117
    %v120 = vmul.f32 %v94, %v113
    %v121 = vmul.f32 %v101, %v118
    %vm124 = vcmask 1041409
    %v125 = vsel %vm124, %v121, %v120
    %vm127 = vcmask 254976
    %128 = vst.msk [vmem:[#allocation2] sm:$0x3] %vm127, %v125
    // Predicated region
    $region14: #{tpu_custom_call.1} parent=1 // pred_check
      _
    $region15: #{tpu_custom_call.1} parent=1 // pred_check_branch
      %130 = sbr.rel (0) target = $region17
    $region16: #{tpu_custom_call.1} parent=1 // pred_region
      %s132 = ssub.s32 32, 32
      %133 = vsyncadd [#allocation3], %s132
      %s135 = sshll.u32 [#allocation2], 4
      %s136 = int_to_ptr.vmem [resolvable:$true] %s135
      %138 = dma.vmem_to_hbm [thread:$0]  %s136, 32, %s3, [#allocation3]
    $region17: #{tpu_custom_call.1} parent=1 // pred_fallthru
      _
    // Predicated region
    $region18: #{tpu_custom_call.1} parent=1 // pred_check
      _
    $region19: #{tpu_custom_call.1} parent=1 // pred_check_branch
      %140 = sbr.rel (0) target = $region21
    $region20: #{tpu_custom_call.1} parent=1 // pred_region
      %141 = dma.done [#allocation3], 32
    $region21: #{tpu_custom_call.1} parent=1 // pred_fallthru
      _
    %142 = vsyncpa [#allocation3], 1

</llo_original>
